<compile_context>
chip_gen: v5e
topology: v5e:2x2
jax: 0.10.0
libtpu: 0.0.40
codegen_flags: <defaults>
</compile_context>

<pallas_src>
import jax
import jax.numpy as jnp
from jax.experimental import pallas as pl
from jax.experimental.pallas import tpu as pltpu


OBS_DIM = 6
ACT_DIM = 2
HIDDEN = 64
OBS_PAD = 8      # obs feature rows padded 6 -> 8 (sublane alignment)
ACT_PAD = 8      # mean head rows padded 2 -> 8 (sublane alignment)
LANE = 128


def _round_up(x, m):
    return ((x + m - 1) // m) * m


def policy_net_kernel(x_ref,
                      w1_ref, b1_ref,
                      w2_ref, b2_ref,
                      w3_ref, b3_ref,
                      wm_ref, bm_ref,
                      mean_ref):
    # Feature-major: x is [OBS_PAD, tile_b] bf16, each layer is W @ x (+ b).
    # bf16 operands feed the MXU; accumulation + bias + tanh stay in f32.
    x = x_ref[...]

    h1 = jnp.tanh(
        jnp.dot(w1_ref[...], x, preferred_element_type=jnp.float32) + b1_ref[...])
    h2 = jnp.tanh(
        jnp.dot(w2_ref[...], h1.astype(jnp.bfloat16),
                preferred_element_type=jnp.float32) + b2_ref[...])
    h = jnp.tanh(
        jnp.dot(w3_ref[...], h2.astype(jnp.bfloat16),
                preferred_element_type=jnp.float32) + b3_ref[...])

    mean = jnp.dot(wm_ref[...], h.astype(jnp.bfloat16),
                   preferred_element_type=jnp.float32) + bm_ref[...]
    mean_ref[...] = mean.astype(mean_ref.dtype)  # [ACT_PAD, tile_b], lane-dense


def init_params(key):
    """Deterministic init mirroring nn.Linear defaults (uniform +-1/sqrt(fan_in)).

    Weights use the torch layout [out_features, in_features]; biases are [out]."""
    keys = jax.random.split(key, 8)

    def linear(kw, kb, fan_in, fan_out):
        bound = 1.0 / jnp.sqrt(jnp.float32(fan_in))
        w = jax.random.uniform(kw, (fan_out, fan_in), jnp.float32, -bound, bound)
        b = jax.random.uniform(kb, (fan_out,), jnp.float32, -bound, bound)
        return w, b

    w1, b1 = linear(keys[0], keys[1], OBS_DIM, HIDDEN)
    w2, b2 = linear(keys[2], keys[3], HIDDEN, HIDDEN)
    w3, b3 = linear(keys[4], keys[5], HIDDEN, HIDDEN)
    wm, bm = linear(keys[6], keys[7], HIDDEN, ACT_DIM)
    log_std = jnp.zeros((ACT_DIM,), jnp.float32)  # nn.Parameter(torch.zeros(act_dim))
    return (w1, b1, w2, b2, w3, b3, wm, bm, log_std)


def prepare_params(params):
    """One-time, per-model prep of kernel-ready parameters (hoisted out of the
    forward pass): zero-pad obs/act dims, cast weights to bf16, reshape biases
    to [out, 1] f32 for lane-broadcast in the feature-major kernel."""
    (w1, b1, w2, b2, w3, b3, wm, bm, log_std) = params

    w1_k = jnp.zeros((HIDDEN, OBS_PAD), jnp.float32).at[:, :OBS_DIM].set(w1)
    wm_k = jnp.zeros((ACT_PAD, HIDDEN), jnp.float32).at[:ACT_DIM, :].set(wm)
    bm_k = jnp.zeros((ACT_PAD, 1), jnp.float32).at[:ACT_DIM, 0].set(bm)

    return (
        w1_k.astype(jnp.bfloat16),              # [64, 8]
        b1.reshape(HIDDEN, 1).astype(jnp.float32),
        w2.astype(jnp.bfloat16),                # [64, 64]
        b2.reshape(HIDDEN, 1).astype(jnp.float32),
        w3.astype(jnp.bfloat16),                # [64, 64]
        b3.reshape(HIDDEN, 1).astype(jnp.float32),
        wm_k.astype(jnp.bfloat16),              # [8, 64]
        bm_k,                                   # [8, 1]
        jnp.asarray(log_std, jnp.float32),      # [ACT_DIM]
    )


def policy_net_forward(obs, kernel_params, tile_b=2048):
    """obs: [B, OBS_DIM] float32.  Returns (mean [B, ACT_DIM], std [B, ACT_DIM])."""
    B, obs_dim = obs.shape
    (w1, b1, w2, b2, w3, b3, wm, bm, log_std) = kernel_params

    # --- batch tiling (batch lives on the lane axis -> tiles are 128-multiples) ---
    tile = max(LANE, min(tile_b, _round_up(B, LANE)))
    tile = (tile // LANE) * LANE
    padded_b = _round_up(B, tile)
    # v7x: make sure there are >= 2 grid steps so both TensorCores get work.
    if padded_b // tile == 1 and B > LANE:
        tile = _round_up((B + 1) // 2, LANE)
        padded_b = _round_up(B, tile)
    grid = (padded_b // tile,)

    # --- feature-major, lane-dense, bf16 input: [OBS_PAD, padded_b] ---
    obs_fm = jnp.zeros((OBS_PAD, padded_b), jnp.bfloat16)
    obs_fm = obs_fm.at[:obs_dim, :B].set(obs.T.astype(jnp.bfloat16))

    weights = (w1, b1, w2, b2, w3, b3, wm, bm)

    def const_spec(a):
        # Fully-resident parameter: same (whole-array) block every grid step.
        return pl.BlockSpec(a.shape, lambda i: (0, 0))

    in_specs = [pl.BlockSpec((OBS_PAD, tile), lambda i: (0, i))]
    in_specs += [const_spec(a) for a in weights]
    out_specs = pl.BlockSpec((ACT_PAD, tile), lambda i: (0, i))

    flops = 2 * padded_b * (OBS_PAD * HIDDEN + 2 * HIDDEN * HIDDEN + HIDDEN * ACT_PAD)
    transcendentals = 3 * padded_b * HIDDEN
    bytes_accessed = (2 * OBS_PAD * padded_b                       # bf16 input
                      + sum(int(a.size) * a.dtype.itemsize for a in weights)
                      + 4 * ACT_PAD * padded_b)                    # f32 output

    mean_fm = pl.pallas_call(
        policy_net_kernel,
        out_shape=jax.ShapeDtypeStruct((ACT_PAD, padded_b), jnp.float32),
        grid=grid,
        in_specs=in_specs,
        out_specs=out_specs,
        compiler_params=pltpu.CompilerParams(
            dimension_semantics=("parallel",),
            vmem_limit_bytes=32 * 1024 * 1024,
        ),
        cost_estimate=pl.CostEstimate(
            flops=flops,
            transcendentals=transcendentals,
            bytes_accessed=bytes_accessed,
        ),
    )(obs_fm, *weights)

    mean = mean_fm[:ACT_DIM, :B].T
    # std = exp(log_std) is obs-independent -> computed outside the kernel.
    std = jnp.broadcast_to(jnp.exp(log_std), mean.shape)
    return mean, std


def reference_forward(obs, params):
    """Pure-JAX f32 reference matching the PyTorch module."""
    (w1, b1, w2, b2, w3, b3, wm, bm, log_std) = params
    h1 = jnp.tanh(obs @ w1.T + b1)
    h2 = jnp.tanh(h1 @ w2.T + b2)
    h = jnp.tanh(h2 @ w3.T + b3)        # MLP ends with Linear; outer tanh in PolicyNet
    mean = h @ wm.T + bm
    std = jnp.broadcast_to(jnp.exp(log_std), mean.shape)
    return mean, std


if __name__ == "__main__":
    key = jax.random.PRNGKey(0)
    k_param, k_obs1, k_obs2 = jax.random.split(key, 3)
    params = init_params(k_param)
    kparams = prepare_params(params)   # one-time prep (bf16 cast / padding)

    # bf16 MXU operands -> loosened tolerances vs. the f32 reference.
    ATOL, RTOL = 3e-2, 3e-2

    # Small batch: single grid step.
    B1 = 8
    obs1 = jax.random.normal(k_obs1, (B1, OBS_DIM), jnp.float32)
    mean1, std1 = policy_net_forward(obs1, kparams)
    jax.block_until_ready((mean1, std1))
    mean1_ref, std1_ref = reference_forward(obs1, params)
    assert mean1.shape == (B1, ACT_DIM) and std1.shape == (B1, ACT_DIM)
    assert jnp.allclose(mean1, mean1_ref, atol=ATOL, rtol=RTOL), "mean mismatch (B=8)"
    assert jnp.allclose(std1, std1_ref, atol=1e-6, rtol=1e-6), "std mismatch (B=8)"

    # Ragged batch: exercises batch padding + a multi-step (>=2) grid.
    B2 = 300
    obs2 = jax.random.normal(k_obs2, (B2, OBS_DIM), jnp.float32)
    mean2, std2 = policy_net_forward(obs2, kparams)
    jax.block_until_ready((mean2, std2))
    mean2_ref, std2_ref = reference_forward(obs2, params)
    assert mean2.shape == (B2, ACT_DIM) and std2.shape == (B2, ACT_DIM)
    assert jnp.allclose(mean2, mean2_ref, atol=ATOL, rtol=RTOL), "mean mismatch (B=300)"
    assert jnp.allclose(std2, std2_ref, atol=1e-6, rtol=1e-6), "std mismatch (B=300)"

    print("KERNEL_OK")
</pallas_src>

<mosaic_0001>
module attributes {stable_mosaic.version = 11 : i64} {
  func.func @policy_net_kernel(%arg0: i32, %arg1: memref<8x128xbf16, #tpu.memory_space<vmem>>, %arg2: memref<64x8xbf16, #tpu.memory_space<vmem>>, %arg3: memref<64x1xf32, #tpu.memory_space<vmem>>, %arg4: memref<64x64xbf16, #tpu.memory_space<vmem>>, %arg5: memref<64x1xf32, #tpu.memory_space<vmem>>, %arg6: memref<64x64xbf16, #tpu.memory_space<vmem>>, %arg7: memref<64x1xf32, #tpu.memory_space<vmem>>, %arg8: memref<8x64xbf16, #tpu.memory_space<vmem>>, %arg9: memref<8x1xf32, #tpu.memory_space<vmem>>, %arg10: memref<8x128xf32, #tpu.memory_space<vmem>>) attributes {dimension_semantics = [#tpu.dimension_semantics<parallel>], iteration_bounds = array<i64: 1>, scalar_prefetch = 0 : i64, scratch_operands = 0 : i64, tpu.core_type = #tpu.core_type<tc>, window_params = [{transform_indices = @transform_0, window_bounds = array<i64: 8, 128>}, {pipeline_mode = #tpu.pipeline_mode<synchronous>, transform_indices = @transform_1, window_bounds = array<i64: 64, 8>}, {pipeline_mode = #tpu.pipeline_mode<synchronous>, transform_indices = @transform_2, window_bounds = array<i64: 64, 1>}, {pipeline_mode = #tpu.pipeline_mode<synchronous>, transform_indices = @transform_3, window_bounds = array<i64: 64, 64>}, {pipeline_mode = #tpu.pipeline_mode<synchronous>, transform_indices = @transform_4, window_bounds = array<i64: 64, 1>}, {pipeline_mode = #tpu.pipeline_mode<synchronous>, transform_indices = @transform_5, window_bounds = array<i64: 64, 64>}, {pipeline_mode = #tpu.pipeline_mode<synchronous>, transform_indices = @transform_6, window_bounds = array<i64: 64, 1>}, {pipeline_mode = #tpu.pipeline_mode<synchronous>, transform_indices = @transform_7, window_bounds = array<i64: 8, 64>}, {pipeline_mode = #tpu.pipeline_mode<synchronous>, transform_indices = @transform_8, window_bounds = array<i64: 8, 1>}, {transform_indices = @transform_9, window_bounds = array<i64: 8, 128>}]} {
    %c0 = arith.constant 0 : index
    %c0_0 = arith.constant 0 : index
    %0 = vector.load %arg1[%c0, %c0_0] : memref<8x128xbf16, #tpu.memory_space<vmem>>, vector<8x128xbf16>
    %c0_1 = arith.constant 0 : index
    %c0_2 = arith.constant 0 : index
    %1 = vector.load %arg2[%c0_1, %c0_2] : memref<64x8xbf16, #tpu.memory_space<vmem>>, vector<64x8xbf16>
    %cst = arith.constant dense<0.000000e+00> : vector<64x128xf32>
    %2 = tpu.matmul %1, %0, %cst {dimension_numbers = #tpu.dot_dimension_numbers<[1], [0], [0], [1], [0, 0, 1, 1], [], []>} : vector<64x8xbf16>, vector<8x128xbf16>, vector<64x128xf32> -> vector<64x128xf32>
    %c0_3 = arith.constant 0 : index
    %c0_4 = arith.constant 0 : index
    %3 = vector.load %arg3[%c0_3, %c0_4] : memref<64x1xf32, #tpu.memory_space<vmem>>, vector<64x1xf32>
    %4 = vector.broadcast %3 : vector<64x1xf32> to vector<64x128xf32>
    %5 = arith.addf %2, %4 : vector<64x128xf32>
    %6 = math.tanh %5 : vector<64x128xf32>
    %c0_5 = arith.constant 0 : index
    %c0_6 = arith.constant 0 : index
    %7 = vector.load %arg4[%c0_5, %c0_6] : memref<64x64xbf16, #tpu.memory_space<vmem>>, vector<64x64xbf16>
    %8 = arith.truncf %6 : vector<64x128xf32> to vector<64x128xbf16>
    %cst_7 = arith.constant dense<0.000000e+00> : vector<64x128xf32>
    %9 = tpu.matmul %7, %8, %cst_7 {dimension_numbers = #tpu.dot_dimension_numbers<[1], [0], [0], [1], [0, 0, 1, 1], [], []>} : vector<64x64xbf16>, vector<64x128xbf16>, vector<64x128xf32> -> vector<64x128xf32>
    %c0_8 = arith.constant 0 : index
    %c0_9 = arith.constant 0 : index
    %10 = vector.load %arg5[%c0_8, %c0_9] : memref<64x1xf32, #tpu.memory_space<vmem>>, vector<64x1xf32>
    %11 = vector.broadcast %10 : vector<64x1xf32> to vector<64x128xf32>
    %12 = arith.addf %9, %11 : vector<64x128xf32>
    %13 = math.tanh %12 : vector<64x128xf32>
    %c0_10 = arith.constant 0 : index
    %c0_11 = arith.constant 0 : index
    %14 = vector.load %arg6[%c0_10, %c0_11] : memref<64x64xbf16, #tpu.memory_space<vmem>>, vector<64x64xbf16>
    %15 = arith.truncf %13 : vector<64x128xf32> to vector<64x128xbf16>
    %cst_12 = arith.constant dense<0.000000e+00> : vector<64x128xf32>
    %16 = tpu.matmul %14, %15, %cst_12 {dimension_numbers = #tpu.dot_dimension_numbers<[1], [0], [0], [1], [0, 0, 1, 1], [], []>} : vector<64x64xbf16>, vector<64x128xbf16>, vector<64x128xf32> -> vector<64x128xf32>
    %c0_13 = arith.constant 0 : index
    %c0_14 = arith.constant 0 : index
    %17 = vector.load %arg7[%c0_13, %c0_14] : memref<64x1xf32, #tpu.memory_space<vmem>>, vector<64x1xf32>
    %18 = vector.broadcast %17 : vector<64x1xf32> to vector<64x128xf32>
    %19 = arith.addf %16, %18 : vector<64x128xf32>
    %20 = math.tanh %19 : vector<64x128xf32>
    %c0_15 = arith.constant 0 : index
    %c0_16 = arith.constant 0 : index
    %21 = vector.load %arg8[%c0_15, %c0_16] : memref<8x64xbf16, #tpu.memory_space<vmem>>, vector<8x64xbf16>
    %22 = arith.truncf %20 : vector<64x128xf32> to vector<64x128xbf16>
    %cst_17 = arith.constant dense<0.000000e+00> : vector<8x128xf32>
    %23 = tpu.matmul %21, %22, %cst_17 {dimension_numbers = #tpu.dot_dimension_numbers<[1], [0], [0], [1], [0, 0, 1, 1], [], []>} : vector<8x64xbf16>, vector<64x128xbf16>, vector<8x128xf32> -> vector<8x128xf32>
    %c0_18 = arith.constant 0 : index
    %c0_19 = arith.constant 0 : index
    %24 = vector.load %arg9[%c0_18, %c0_19] : memref<8x1xf32, #tpu.memory_space<vmem>>, vector<8x1xf32>
    %25 = vector.broadcast %24 : vector<8x1xf32> to vector<8x128xf32>
    %26 = arith.addf %23, %25 : vector<8x128xf32>
    %c0_20 = arith.constant 0 : index
    %c0_21 = arith.constant 0 : index
    %27 = vector.load %arg10[%c0_20, %c0_21] : memref<8x128xf32, #tpu.memory_space<vmem>>, vector<8x128xf32>
    tpu.vector_store %arg10[%c0_20, %c0_21], %26 {strides = array<i32>} : memref<8x128xf32, #tpu.memory_space<vmem>>, vector<8x128xf32>,
    return
  }
  func.func @transform_0(%arg0: i32) -> (i32, i32) {
    %c0_i32 = arith.constant 0 : i32
    %c0_i32_0 = arith.constant 0 : i32
    return %c0_i32, %arg0 : i32, i32
  }
  func.func @transform_1(%arg0: i32) -> (i32, i32) {
    %c0_i32 = arith.constant 0 : i32
    %c0_i32_0 = arith.constant 0 : i32
    %c0_i32_1 = arith.constant 0 : i32
    return %c0_i32, %c0_i32_0 : i32, i32
  }
  func.func @transform_2(%arg0: i32) -> (i32, i32) {
    %c0_i32 = arith.constant 0 : i32
    %c0_i32_0 = arith.constant 0 : i32
    %c0_i32_1 = arith.constant 0 : i32
    return %c0_i32, %c0_i32_0 : i32, i32
  }
  func.func @transform_3(%arg0: i32) -> (i32, i32) {
    %c0_i32 = arith.constant 0 : i32
    %c0_i32_0 = arith.constant 0 : i32
    %c0_i32_1 = arith.constant 0 : i32
    return %c0_i32, %c0_i32_0 : i32, i32
  }
  func.func @transform_4(%arg0: i32) -> (i32, i32) {
    %c0_i32 = arith.constant 0 : i32
    %c0_i32_0 = arith.constant 0 : i32
    %c0_i32_1 = arith.constant 0 : i32
    return %c0_i32, %c0_i32_0 : i32, i32
  }
  func.func @transform_5(%arg0: i32) -> (i32, i32) {
    %c0_i32 = arith.constant 0 : i32
    %c0_i32_0 = arith.constant 0 : i32
    %c0_i32_1 = arith.constant 0 : i32
    return %c0_i32, %c0_i32_0 : i32, i32
  }
  func.func @transform_6(%arg0: i32) -> (i32, i32) {
    %c0_i32 = arith.constant 0 : i32
    %c0_i32_0 = arith.constant 0 : i32
    %c0_i32_1 = arith.constant 0 : i32
    return %c0_i32, %c0_i32_0 : i32, i32
  }
  func.func @transform_7(%arg0: i32) -> (i32, i32) {
    %c0_i32 = arith.constant 0 : i32
    %c0_i32_0 = arith.constant 0 : i32
    %c0_i32_1 = arith.constant 0 : i32
    return %c0_i32, %c0_i32_0 : i32, i32
  }
  func.func @transform_8(%arg0: i32) -> (i32, i32) {
    %c0_i32 = arith.constant 0 : i32
    %c0_i32_0 = arith.constant 0 : i32
    %c0_i32_1 = arith.constant 0 : i32
    return %c0_i32, %c0_i32_0 : i32, i32
  }
  func.func @transform_9(%arg0: i32) -> (i32, i32) {
    %c0_i32 = arith.constant 0 : i32
    %c0_i32_0 = arith.constant 0 : i32
    return %c0_i32, %arg0 : i32, i32
  }
}

</mosaic_0001>

<llo_original>
// kernel: tpu_custom_call.1
$region0: #{tpu_custom_call.1}
  #allocation0 [shape = 'u32[]', space=smem, size = 0x4, offset = 0x4, fixed_abs, tag = 'smem constant byte address 0x4 - core index']
  #allocation1 [shape = 'u32[72,128]{1,0:T(1,128)}', space=vmem, size = 0x9000, scoped, tag = 'internal scratch']
  %s0 = inlined_call_operand.vmem [shape: bf16[8,128], index: 0, kind: input, shape index: {}]
  %s1 = inlined_call_operand.vmem [shape: bf16[64,8], index: 1, kind: input, shape index: {}]
  %s2 = inlined_call_operand.vmem [shape: f32[64,1], index: 2, kind: input, shape index: {}]
  %s3 = inlined_call_operand.vmem [shape: bf16[64,64], index: 3, kind: input, shape index: {}]
  %s4 = inlined_call_operand.vmem [shape: f32[64,1], index: 4, kind: input, shape index: {}]
  %s5 = inlined_call_operand.vmem [shape: bf16[64,64], index: 5, kind: input, shape index: {}]
  %s6 = inlined_call_operand.vmem [shape: f32[64,1], index: 6, kind: input, shape index: {}]
  %s7 = inlined_call_operand.vmem [shape: bf16[8,64], index: 7, kind: input, shape index: {}]
  %s8 = inlined_call_operand.vmem [shape: f32[8,1], index: 8, kind: input, shape index: {}]
  %s9 = inlined_call_operand.hbm [shape: f32[8,128], index: 9, kind: output, shape index: {}]
  %s10 = sld [smem:[#allocation0]]
  $region46: #{tpu_custom_call.1} parent=0
    _
  %s12 = ssub.s32 1, %s10
  %s13 = scalar_select 0, %s12, %s10
  $region1: #{tpu_custom_call.1} parent=0
    #allocation2 [shape = 'u8[4096]{0}', space=vmem, size = 0x1000, scoped, tag = 'output window, operand 0, single buffered']
    #allocation3 [shape = 's32[1]{0}', space=sflag, size = 0x4, scoped, tag = 'scoped memory for tpu_custom_call.1']
    %14 = vsyncpa [#allocation3], 0
    // Predicated region
    $region2: #{tpu_custom_call.1} parent=1 // pred_check
      _
    $region3: #{tpu_custom_call.1} parent=1 // pred_check_branch
      %16 = sbr.rel (0) target = $region5
    $region4: #{tpu_custom_call.1} parent=1 // pred_region
      _
    $region5: #{tpu_custom_call.1} parent=1 // pred_fallthru
      _
    // Predicated region
    $region6: #{tpu_custom_call.1} parent=1 // pred_check
      _
    $region7: #{tpu_custom_call.1} parent=1 // pred_check_branch
      %18 = sbr.rel (0) target = $region9
    $region8: #{tpu_custom_call.1} parent=1 // pred_region
      _
    $region9: #{tpu_custom_call.1} parent=1 // pred_fallthru
      _
    // Predicated region
    $region10: #{tpu_custom_call.1} parent=1 // pred_check
      _
    $region11: #{tpu_custom_call.1} parent=1 // pred_check_branch
      %20 = sbr.rel (0) target = $region13
    $region12: #{tpu_custom_call.1} parent=1 // pred_region
      _
    $region13: #{tpu_custom_call.1} parent=1 // pred_fallthru
      _
    // Predicated region
    $region14: #{tpu_custom_call.1} parent=1 // pred_check
      _
    $region15: #{tpu_custom_call.1} parent=1 // pred_check_branch
      %22 = sbr.rel (0) target = $region17
    $region16: #{tpu_custom_call.1} parent=1 // pred_region
      _
    $region17: #{tpu_custom_call.1} parent=1 // pred_fallthru
      _
    // Predicated region
    $region18: #{tpu_custom_call.1} parent=1 // pred_check
      _
    $region19: #{tpu_custom_call.1} parent=1 // pred_check_branch
      %24 = sbr.rel (0) target = $region21
    $region20: #{tpu_custom_call.1} parent=1 // pred_region
      _
    $region21: #{tpu_custom_call.1} parent=1 // pred_fallthru
      _
    // Predicated region
    $region22: #{tpu_custom_call.1} parent=1 // pred_check
      _
    $region23: #{tpu_custom_call.1} parent=1 // pred_check_branch
      %26 = sbr.rel (0) target = $region25
    $region24: #{tpu_custom_call.1} parent=1 // pred_region
      _
    $region25: #{tpu_custom_call.1} parent=1 // pred_fallthru
      _
    // Predicated region
    $region26: #{tpu_custom_call.1} parent=1 // pred_check
      _
    $region27: #{tpu_custom_call.1} parent=1 // pred_check_branch
      %28 = sbr.rel (0) target = $region29
    $region28: #{tpu_custom_call.1} parent=1 // pred_region
      _
    $region29: #{tpu_custom_call.1} parent=1 // pred_fallthru
      _
    // Predicated region
    $region30: #{tpu_custom_call.1} parent=1 // pred_check
      _
    $region31: #{tpu_custom_call.1} parent=1 // pred_check_branch
      %30 = sbr.rel (0) target = $region33
    $region32: #{tpu_custom_call.1} parent=1 // pred_region
      _
    $region33: #{tpu_custom_call.1} parent=1 // pred_fallthru
      _
    // Predicated region
    $region34: #{tpu_custom_call.1} parent=1 // pred_check
      _
    $region35: #{tpu_custom_call.1} parent=1 // pred_check_branch
      %32 = sbr.rel (0) target = $region37
    $region36: #{tpu_custom_call.1} parent=1 // pred_region
      _
    $region37: #{tpu_custom_call.1} parent=1 // pred_fallthru
      _
    %v34 = vld [vmem:[%s0] sm:$0xf]
    %v35 = vld [vmem:[%s1] sm:$0xf]
    %v36 = vld [vmem:[%s1 + $0x4] sm:$0xf]
    %v37 = vld [vmem:[%s1 + $0x8] sm:$0xf]
    %v38 = vld [vmem:[%s1 + $0xc] sm:$0xf]
    %v39 = vld [vmem:[%s1 + $0x10] sm:$0xf]
    %v40 = vld [vmem:[%s1 + $0x14] sm:$0xf]
    %v41 = vld [vmem:[%s1 + $0x18] sm:$0xf]
    %v42 = vld [vmem:[%s1 + $0x1c] sm:$0xf]
    %v43 = vld [vmem:[%s2] sm:$0xff]
    %v44 = vld [vmem:[%s2 + $0x8] sm:$0xff]
    %v45 = vld [vmem:[%s2 + $0x10] sm:$0xff]
    %v46 = vld [vmem:[%s2 + $0x18] sm:$0xff]
    %v47 = vld [vmem:[%s2 + $0x20] sm:$0xff]
    %v48 = vld [vmem:[%s2 + $0x28] sm:$0xff]
    %v49 = vld [vmem:[%s2 + $0x30] sm:$0xff]
    %v50 = vld [vmem:[%s2 + $0x38] sm:$0xff]
    %52 = vset.pattern.permute.xlu0 0
    %53 = vperm.xlu0 %52, %v43
    %v54 = vpop.permute.xlu0 %53
    %57 = vset.pattern.permute.xlu0 0
    %58 = vperm.xlu0 %57, %v44
    %v59 = vpop.permute.xlu0 %58
    %62 = vset.pattern.permute.xlu0 0
    %63 = vperm.xlu0 %62, %v45
    %v64 = vpop.permute.xlu0 %63
    %67 = vset.pattern.permute.xlu0 0
    %68 = vperm.xlu0 %67, %v46
    %v69 = vpop.permute.xlu0 %68
    %72 = vset.pattern.permute.xlu0 0
    %73 = vperm.xlu0 %72, %v47
    %v74 = vpop.permute.xlu0 %73
    %77 = vset.pattern.permute.xlu0 0
    %78 = vperm.xlu0 %77, %v48
    %v79 = vpop.permute.xlu0 %78
    %82 = vset.pattern.permute.xlu0 0
    %83 = vperm.xlu0 %82, %v49
    %v84 = vpop.permute.xlu0 %83
    %87 = vset.pattern.permute.xlu0 0
    %88 = vperm.xlu0 %87, %v50
    %v89 = vpop.permute.xlu0 %88
    %v99 = vunpack.c.l.b16 %v35
    %v100 = vunpack.c.l.b16 %v36
    %v101 = vunpack.c.l.b16 %v37
    %v102 = vunpack.c.l.b16 %v38
    %v103 = vunpack.c.l.b16 %v39
    %v104 = vunpack.c.l.b16 %v40
    %v105 = vunpack.c.l.b16 %v41
    %v106 = vunpack.c.l.b16 %v42
    %v107 = vpack.c.b16 %v100, %v99
    %v108 = vpack.c.b16 %v102, %v101
    %v109 = vpack.c.b16 %v104, %v103
    %v110 = vpack.c.b16 %v106, %v105
    %vm111 = vcmask 64512
    %v113 = vsel %vm111, %v107, 0
    %v116 = vsel %vm111, %v108, 0
    %v119 = vsel %vm111, %v109, 0
    %v122 = vsel %vm111, %v110, 0
    %vm124 = vcmask 1043456
    %v126 = vsel %vm124, %v34, 0
    %128 = vmatpush.bf16.msra.mxu0 0
    %129 = vmatpush.bf16.msra.mxu0 0
    %130 = vmatpush.bf16.msra.mxu0 0
    %131 = vmatpush.bf16.msra.mxu0 0
    %132 = vmatpush.bf16.msra.mxu0 0
    %133 = vmatpush.bf16.msra.mxu0 0
    %134 = vmatpush.bf16.msra.mxu0 0
    %135 = vmatpush.bf16.msra.mxu0 %v126
    %136 = vmatmul.bf16.gmra.mxu0 %v113
    %v137 = vpop.f32.mrf.mxu0
    %v138 = vadd.f32 %v54, %v137
    %v139 = vpop.f32.mrf.mxu0
    %v140 = vadd.f32 %v59, %v139
    %141 = vmatmul.bf16.gmra.mxu0 %v116
    %v142 = vpop.f32.mrf.mxu0
    %v143 = vadd.f32 %v64, %v142
    %v144 = vpop.f32.mrf.mxu0
    %v145 = vadd.f32 %v69, %v144
    %146 = vmatmul.bf16.gmra.mxu0 %v119
    %v147 = vpop.f32.mrf.mxu0
    %v148 = vadd.f32 %v74, %v147
    %v149 = vpop.f32.mrf.mxu0
    %v150 = vadd.f32 %v79, %v149
    %151 = vmatmul.bf16.gmra.mxu0 %v122
    %v152 = vpop.f32.mrf.mxu0
    %v153 = vadd.f32 %v84, %v152
    %v154 = vpop.f32.mrf.mxu0
    %v155 = vadd.f32 %v89, %v154
    %156 = vdwg.mxu0
    %v157 = vtanh.pop %v138
    %v158 = vtanh.pop %v140
    %v159 = vtanh.pop %v143
    %v160 = vtanh.pop %v145
    %v161 = vtanh.pop %v148
    %v162 = vtanh.pop %v150
    %v163 = vtanh.pop %v153
    %v164 = vtanh.pop %v155
    %v165 = vld [vmem:[%s3] sm:$0xf]
    %v166 = vld [vmem:[%s3 + $0x4] sm:$0xf]
    %v167 = vld [vmem:[%s3 + $0x8] sm:$0xf]
    %v168 = vld [vmem:[%s3 + $0xc] sm:$0xf]
    %v169 = vld [vmem:[%s3 + $0x10] sm:$0xf]
    %v170 = vld [vmem:[%s3 + $0x14] sm:$0xf]
    %v171 = vld [vmem:[%s3 + $0x18] sm:$0xf]
    %v172 = vld [vmem:[%s3 + $0x1c] sm:$0xf]
    %v173 = vpack.c.bf16 %v158, %v157
    %v174 = vpack.c.bf16 %v160, %v159
    %v175 = vpack.c.bf16 %v162, %v161
    %v176 = vpack.c.bf16 %v164, %v163
    %v177 = vld [vmem:[%s4] sm:$0xff]
    %v178 = vld [vmem:[%s4 + $0x8] sm:$0xff]
    %v179 = vld [vmem:[%s4 + $0x10] sm:$0xff]
    %v180 = vld [vmem:[%s4 + $0x18] sm:$0xff]
    %v181 = vld [vmem:[%s4 + $0x20] sm:$0xff]
    %v182 = vld [vmem:[%s4 + $0x28] sm:$0xff]
    %v183 = vld [vmem:[%s4 + $0x30] sm:$0xff]
    %v184 = vld [vmem:[%s4 + $0x38] sm:$0xff]
    %186 = vset.pattern.permute.xlu0 0
    %187 = vperm.xlu0 %186, %v177
    %v188 = vpop.permute.xlu0 %187
    %191 = vset.pattern.permute.xlu0 0
    %192 = vperm.xlu0 %191, %v178
    %v193 = vpop.permute.xlu0 %192
    %196 = vset.pattern.permute.xlu0 0
    %197 = vperm.xlu0 %196, %v179
    %v198 = vpop.permute.xlu0 %197
    %201 = vset.pattern.permute.xlu0 0
    %202 = vperm.xlu0 %201, %v180
    %v203 = vpop.permute.xlu0 %202
    %206 = vset.pattern.permute.xlu0 0
    %207 = vperm.xlu0 %206, %v181
    %v208 = vpop.permute.xlu0 %207
    %211 = vset.pattern.permute.xlu0 0
    %212 = vperm.xlu0 %211, %v182
    %v213 = vpop.permute.xlu0 %212
    %216 = vset.pattern.permute.xlu0 0
    %217 = vperm.xlu0 %216, %v183
    %v218 = vpop.permute.xlu0 %217
    %221 = vset.pattern.permute.xlu0 0
    %222 = vperm.xlu0 %221, %v184
    %v223 = vpop.permute.xlu0 %222
    %v233 = vunpack.c.l.b16 %v165
    %v234 = vunpack.c.l.b16 %v166
    %v235 = vunpack.c.l.b16 %v167
    %v236 = vunpack.c.l.b16 %v168
    %v237 = vunpack.c.l.b16 %v169
    %v238 = vunpack.c.l.b16 %v170
    %v239 = vunpack.c.l.b16 %v171
    %v240 = vunpack.c.l.b16 %v172
    %v241 = vpack.c.b16 %v234, %v233
    %v242 = vpack.c.b16 %v236, %v235
    %v243 = vpack.c.b16 %v238, %v237
    %v244 = vpack.c.b16 %v240, %v239
    %vm245 = vcmask 523264
    %v247 = vsel %vm245, %v241, 0
    %v250 = vsel %vm245, %v242, 0
    %v253 = vsel %vm245, %v243, 0
    %v256 = vsel %vm245, %v244, 0
    %258 = vmatpush.bf16.msra.mxu0 0
    %259 = vmatpush.bf16.msra.mxu0 0
    %260 = vmatpush.bf16.msra.mxu0 0
    %261 = vmatpush.bf16.msra.mxu0 0
    %262 = vmatpush.bf16.msra.mxu0 %v176
    %263 = vmatpush.bf16.msra.mxu0 %v175
    %264 = vmatpush.bf16.msra.mxu0 %v174
    %265 = vmatpush.bf16.msra.mxu0 %v173
    %266 = vmatmul.bf16.gmra.mxu0 %v247
    %v267 = vpop.f32.mrf.mxu0
    %v268 = vadd.f32 %v188, %v267
    %v269 = vpop.f32.mrf.mxu0
    %v270 = vadd.f32 %v193, %v269
    %271 = vmatmul.bf16.gmra.mxu0 %v250
    %v272 = vpop.f32.mrf.mxu0
    %v273 = vadd.f32 %v198, %v272
    %v274 = vpop.f32.mrf.mxu0
    %v275 = vadd.f32 %v203, %v274
    %276 = vmatmul.bf16.gmra.mxu0 %v253
    %v277 = vpop.f32.mrf.mxu0
    %v278 = vadd.f32 %v208, %v277
    %v279 = vpop.f32.mrf.mxu0
    %v280 = vadd.f32 %v213, %v279
    %281 = vmatmul.bf16.gmra.mxu0 %v256
    %v282 = vpop.f32.mrf.mxu0
    %v283 = vadd.f32 %v218, %v282
    %v284 = vpop.f32.mrf.mxu0
    %v285 = vadd.f32 %v223, %v284
    %286 = vdwg.mxu0
    %v287 = vtanh.pop %v268
    %v288 = vtanh.pop %v270
    %v289 = vtanh.pop %v273
    %v290 = vtanh.pop %v275
    %v291 = vtanh.pop %v278
    %v292 = vtanh.pop %v280
    %v293 = vtanh.pop %v283
    %v294 = vtanh.pop %v285
    %v295 = vld [vmem:[%s5] sm:$0xf]
    %v296 = vld [vmem:[%s5 + $0x4] sm:$0xf]
    %v297 = vld [vmem:[%s5 + $0x8] sm:$0xf]
    %v298 = vld [vmem:[%s5 + $0xc] sm:$0xf]
    %v299 = vld [vmem:[%s5 + $0x10] sm:$0xf]
    %v300 = vld [vmem:[%s5 + $0x14] sm:$0xf]
    %v301 = vld [vmem:[%s5 + $0x18] sm:$0xf]
    %v302 = vld [vmem:[%s5 + $0x1c] sm:$0xf]
    %v303 = vpack.c.bf16 %v288, %v287
    %v304 = vpack.c.bf16 %v290, %v289
    %v305 = vpack.c.bf16 %v292, %v291
    %v306 = vpack.c.bf16 %v294, %v293
    %v307 = vld [vmem:[%s6] sm:$0xff]
    %v308 = vld [vmem:[%s6 + $0x8] sm:$0xff]
    %v309 = vld [vmem:[%s6 + $0x10] sm:$0xff]
    %v310 = vld [vmem:[%s6 + $0x18] sm:$0xff]
    %v311 = vld [vmem:[%s6 + $0x20] sm:$0xff]
    %v312 = vld [vmem:[%s6 + $0x28] sm:$0xff]
    %v313 = vld [vmem:[%s6 + $0x30] sm:$0xff]
    %v314 = vld [vmem:[%s6 + $0x38] sm:$0xff]
    %316 = vset.pattern.permute.xlu0 0
    %317 = vperm.xlu0 %316, %v307
    %v318 = vpop.permute.xlu0 %317
    %321 = vset.pattern.permute.xlu0 0
    %322 = vperm.xlu0 %321, %v308
    %v323 = vpop.permute.xlu0 %322
    %326 = vset.pattern.permute.xlu0 0
    %327 = vperm.xlu0 %326, %v309
    %v328 = vpop.permute.xlu0 %327
    %331 = vset.pattern.permute.xlu0 0
    %332 = vperm.xlu0 %331, %v310
    %v333 = vpop.permute.xlu0 %332
    %336 = vset.pattern.permute.xlu0 0
    %337 = vperm.xlu0 %336, %v311
    %v338 = vpop.permute.xlu0 %337
    %341 = vset.pattern.permute.xlu0 0
    %342 = vperm.xlu0 %341, %v312
    %v343 = vpop.permute.xlu0 %342
    %346 = vset.pattern.permute.xlu0 0
    %347 = vperm.xlu0 %346, %v313
    %v348 = vpop.permute.xlu0 %347
    %351 = vset.pattern.permute.xlu0 0
    %352 = vperm.xlu0 %351, %v314
    %v353 = vpop.permute.xlu0 %352
    %v363 = vunpack.c.l.b16 %v295
    %v364 = vunpack.c.l.b16 %v296
    %v365 = vunpack.c.l.b16 %v297
    %v366 = vunpack.c.l.b16 %v298
    %v367 = vunpack.c.l.b16 %v299
    %v368 = vunpack.c.l.b16 %v300
    %v369 = vunpack.c.l.b16 %v301
    %v370 = vunpack.c.l.b16 %v302
    %v371 = vpack.c.b16 %v364, %v363
    %v372 = vpack.c.b16 %v366, %v365
    %v373 = vpack.c.b16 %v368, %v367
    %v374 = vpack.c.b16 %v370, %v369
    %v376 = vsel %vm245, %v371, 0
    %v379 = vsel %vm245, %v372, 0
    %v382 = vsel %vm245, %v373, 0
    %v385 = vsel %vm245, %v374, 0
    %387 = vmatpush.bf16.msra.mxu0 0
    %388 = vmatpush.bf16.msra.mxu0 0
    %389 = vmatpush.bf16.msra.mxu0 0
    %390 = vmatpush.bf16.msra.mxu0 0
    %391 = vmatpush.bf16.msra.mxu0 %v306
    %392 = vmatpush.bf16.msra.mxu0 %v305
    %393 = vmatpush.bf16.msra.mxu0 %v304
    %394 = vmatpush.bf16.msra.mxu0 %v303
    %395 = vmatmul.bf16.gmra.mxu0 %v376
    %v396 = vpop.f32.mrf.mxu0
    %v397 = vadd.f32 %v318, %v396
    %v398 = vpop.f32.mrf.mxu0
    %v399 = vadd.f32 %v323, %v398
    %400 = vmatmul.bf16.gmra.mxu0 %v379
    %v401 = vpop.f32.mrf.mxu0
    %v402 = vadd.f32 %v328, %v401
    %v403 = vpop.f32.mrf.mxu0
    %v404 = vadd.f32 %v333, %v403
    %405 = vmatmul.bf16.gmra.mxu0 %v382
    %v406 = vpop.f32.mrf.mxu0
    %v407 = vadd.f32 %v338, %v406
    %v408 = vpop.f32.mrf.mxu0
    %v409 = vadd.f32 %v343, %v408
    %410 = vmatmul.bf16.gmra.mxu0 %v385
    %v411 = vpop.f32.mrf.mxu0
    %v412 = vadd.f32 %v348, %v411
    %v413 = vpop.f32.mrf.mxu0
    %v414 = vadd.f32 %v353, %v413
    %415 = vdwg.mxu0
    %v416 = vtanh.pop %v397
    %v417 = vtanh.pop %v399
    %v418 = vtanh.pop %v402
    %v419 = vtanh.pop %v404
    %v420 = vtanh.pop %v407
    %v421 = vtanh.pop %v409
    %v422 = vtanh.pop %v412
    %v423 = vtanh.pop %v414
    %v424 = vld [vmem:[%s7] sm:$0xf]
    %v425 = vpack.c.bf16 %v417, %v416
    %v426 = vpack.c.bf16 %v419, %v418
    %v427 = vpack.c.bf16 %v421, %v420
    %v428 = vpack.c.bf16 %v423, %v422
    %v429 = vld [vmem:[%s8] sm:$0xff]
    %431 = vset.pattern.permute.xlu0 0
    %432 = vperm.xlu0 %431, %v429
    %v433 = vpop.permute.xlu0 %432
    %v436 = vsel %vm245, %v424, 0
    %438 = vmatpush.bf16.msra.mxu0 0
    %439 = vmatpush.bf16.msra.mxu0 0
    %440 = vmatpush.bf16.msra.mxu0 0
    %441 = vmatpush.bf16.msra.mxu0 0
    %442 = vmatpush.bf16.msra.mxu0 %v428
    %443 = vmatpush.bf16.msra.mxu0 %v427
    %444 = vmatpush.bf16.msra.mxu0 %v426
    %445 = vmatpush.bf16.msra.mxu0 %v425
    %446 = vmatmul.bf16.gmra.mxu0 %v436
    %v447 = vpop.f32.mrf.mxu0
    %v448 = vadd.f32 %v433, %v447
    %v449 = vpop.f32.mrf.mxu0
    %450 = vdwg.mxu0
    %451 = vst [vmem:[#allocation2] sm:$0xff] %v448
    // Predicated region
    $region38: #{tpu_custom_call.1} parent=1 // pred_check
      _
    $region39: #{tpu_custom_call.1} parent=1 // pred_check_branch
      %453 = sbr.rel (0) target = $region41
    $region40: #{tpu_custom_call.1} parent=1 // pred_region
      %455 = vsyncadd [#allocation3], 0
      %s457 = sshll.u32 [#allocation2], 4
      %s458 = int_to_ptr.vmem [resolvable:$true] %s457
      %s459 = sshll.u32 %s9, 4
      %s460 = int_to_ptr.hbm [resolvable:$true] %s459
      %462 = dma.vmem_to_hbm [thread:$0]  %s458, 128, %s460, [#allocation3]
    $region41: #{tpu_custom_call.1} parent=1 // pred_fallthru
      _
    // Predicated region
    $region42: #{tpu_custom_call.1} parent=1 // pred_check
      _
    $region43: #{tpu_custom_call.1} parent=1 // pred_check_branch
      %464 = sbr.rel (0) target = $region45
    $region44: #{tpu_custom_call.1} parent=1 // pred_region
      %466 = dma.done [#allocation3], 128
    $region45: #{tpu_custom_call.1} parent=1 // pred_fallthru
      _
    %467 = vsyncpa [#allocation3], 1

</llo_original>
